<compile_context>
chip_gen: v7x
topology: tpu7x:2x2x1
jax: 0.10.0
libtpu: 0.0.40
codegen_flags: <defaults>
</compile_context>

<pallas_src>
import functools

import jax
import jax.numpy as jnp
from jax import lax
from jax.experimental import pallas as pl
from jax.experimental.pallas import tpu as pltpu


def _round_up(x, m):
    return (x + m - 1) // m * m


# Large tiles amortize the ~0.35 us/grid-step overhead; 1024/2048 only engage on the
# 128 MiB-VMEM chips (v5e/v6e) because the VMEM fit check below gates them.
_TILE_M_CANDIDATES = (2048, 1024, 512, 256, 128, 64, 32, 16, 8)


def _vmem_budget():
    """Returns (vmem_limit_bytes, tile_budget_bytes), sized per TPU generation."""
    try:
        cap = int(pltpu.get_tpu_info().vmem_capacity_bytes)
    except Exception:  # no TPU info available (e.g. interpret mode) -> v7x-conservative
        cap = 64 * 1024 * 1024
    vmem_limit = min(3 * cap // 4, 96 * 1024 * 1024)
    tile_budget = vmem_limit - 4 * 1024 * 1024  # headroom for compiler scratch
    return vmem_limit, tile_budget


def _choose_tile_m(n, fea_p, mem_p, x_isz, w_isz, tile_budget, *, weight_buffers):
    """Largest candidate row tile whose working set fits the VMEM budget."""
    # Weight footprint: 1 buffer on the primary Buffered(1) path, 2 on the fallback.
    w_bytes = weight_buffers * mem_p * fea_p * w_isz
    # Per-row working set: double-buffered x / out / att tiles plus f32 intermediates
    # (logits, e, shifted, att can all be live before fusion -> ~4*mem_p f32 per row).
    per_row = (2 * fea_p + 2 * fea_p + 2 * mem_p) * x_isz
    per_row += (4 * mem_p + fea_p) * 4
    avail = tile_budget - w_bytes
    if avail <= 0:
        # TODO(synk): weight alone exceeds the VMEM tile budget (realistic on v7x's
        # 64 MiB for large mem_dim); needs a second "arbitrary" grid axis tiling
        # mem_dim with an online-softmax accumulator instead of a full-weight block.
        return 8
    rows_fit = max(avail // per_row, 8)
    n_rows = _round_up(n, 8)
    for cand in _TILE_M_CANDIDATES:
        if cand > rows_fit:
            continue
        # Keep at least 2 grid steps whenever N allows so both v7x TensorCores get
        # work and the pipeline has DMA/compute to overlap.
        if n_rows > 8 and cand * 2 > n_rows:
            continue
        return cand
    return 8


def _memory_unit_kernel(x_ref, w_ref, *rest, shrink_thres, has_bias, mxu_dtype):
    if has_bias:
        bias_ref, out_ref, att_ref = rest
    else:
        out_ref, att_ref = rest

    x = x_ref[...].astype(mxu_dtype)     # (TM, fea_p)
    w = w_ref[...].astype(mxu_dtype)     # (mem_p, fea_p)

    # att_weight = x @ W^T : contract fea_dim of both operands directly (MXU matmul
    # with a transposed-RHS operand; no explicit in-kernel weight transpose).
    logits = lax.dot_general(
        x, w,
        dimension_numbers=(((1,), (1,)), ((), ())),
        preferred_element_type=jnp.float32,
    )                                     # (TM, mem_p) f32

    if has_bias:
        # Precomputed additive mask row (0 for valid, -1e30 for padded memory slots):
        # one VALU add instead of iota+compare+select recomputed every grid step.
        logits = logits + bias_ref[...]

    # Softmax over the memory dimension.  Exact division: approx reciprocals here
    # carry ~1e-3 relative error and break parity with the reference.
    m = jnp.max(logits, axis=-1, keepdims=True)
    e = jnp.exp(logits - m)
    att = e / jnp.sum(e, axis=-1, keepdims=True)

    if shrink_thres > 0:
        lam = jnp.float32(shrink_thres)
        eps = jnp.float32(1e-12)
        shifted = att - lam
        # hard_shrink_relu: relu(att - lam) * att / (|att - lam| + eps)
        att = jnp.maximum(shifted, 0.0) * att / (jnp.abs(shifted) + eps)
        # F.normalize(p=1, dim=1): att is nonnegative after the relu-based shrink,
        # so the L1 norm is a plain row-sum (no abs pass over (TM, mem_p)).
        l1 = jnp.sum(att, axis=-1, keepdims=True)
        att = att / jnp.maximum(l1, jnp.float32(1e-12))

    # output = att @ W.  Padded att columns are exactly zero, so padded (zero) weight
    # rows are inert.  att is cast to the MXU dtype (bf16 on the opt-in fast path).
    out = jnp.dot(att.astype(mxu_dtype), w, preferred_element_type=jnp.float32)

    out_ref[...] = out.astype(out_ref.dtype)
    att_ref[...] = att.astype(att_ref.dtype)


def memory_unit_forward(x, weight, shrink_thres=0.0025, *, use_bf16_mxu=None):
    """x: (N, fea_dim); weight: (mem_dim, fea_dim). Returns (output, att_weight).

    use_bf16_mxu: opt-in native-rate MXU path (bf16 GEMM inputs, f32 accumulation;
    softmax/shrink math stays f32).  Defaults to True only when the inputs are
    already bf16, so f32 inputs keep full reference precision.
    """
    n, fea_dim = x.shape
    mem_dim, fea_dim_w = weight.shape
    assert fea_dim == fea_dim_w

    if use_bf16_mxu is None:
        use_bf16_mxu = (x.dtype == jnp.bfloat16 and weight.dtype == jnp.bfloat16)
    mxu_dtype = jnp.bfloat16 if use_bf16_mxu else jnp.dtype(weight.dtype)

    # Lane-align the last dims to 128 for unmasked (dense) vector stores and full
    # MXU tiles.
    fea_p = _round_up(fea_dim, 128)
    mem_p = _round_up(mem_dim, 128)
    mem_padded = mem_p != mem_dim

    vmem_limit, tile_budget = _vmem_budget()
    x_isz = jnp.dtype(x.dtype).itemsize
    w_isz = jnp.dtype(weight.dtype).itemsize

    w_p = weight
    if mem_padded or fea_p != fea_dim:
        w_p = jnp.pad(weight, ((0, mem_p - mem_dim), (0, fea_p - fea_dim)))

    bias = None
    if mem_padded:
        bias = jnp.where(jnp.arange(mem_p) < mem_dim, 0.0, -1e30)
        bias = bias.reshape(1, mem_p).astype(jnp.float32)

    kernel = functools.partial(
        _memory_unit_kernel,
        shrink_thres=float(shrink_thres),
        has_bias=mem_padded,
        mxu_dtype=mxu_dtype,
    )

    def _run(single_buffer_weight):
        tile_m = _choose_tile_m(
            n, fea_p, mem_p, x_isz, w_isz, tile_budget,
            weight_buffers=1 if single_buffer_weight else 2)
        n_pad = _round_up(n, tile_m)

        x_p = x
        if n_pad != n or fea_p != fea_dim:
            x_p = jnp.pad(x, ((0, n_pad - n), (0, fea_p - fea_dim)))

        # Weight is grid-invariant -> single-buffer it to halve its VMEM footprint.
        w_kwargs = dict(pipeline_mode=pl.Buffered(1)) if single_buffer_weight else {}
        in_specs = [
            pl.BlockSpec((tile_m, fea_p), lambda i: (i, 0)),             # x row tile
            pl.BlockSpec((mem_p, fea_p), lambda i: (0, 0), **w_kwargs),  # full weight
        ]
        args = [x_p, w_p]
        if mem_padded:
            in_specs.append(pl.BlockSpec((1, mem_p), lambda i: (0, 0)))  # mask bias row
            args.append(bias)
        out_specs = [
            pl.BlockSpec((tile_m, fea_p), lambda i: (i, 0)),             # output rows
            pl.BlockSpec((tile_m, mem_p), lambda i: (i, 0)),             # att rows
        ]

        cost = pl.CostEstimate(
            flops=2 * 2 * n_pad * mem_p * fea_p,                 # two GEMMs
            transcendentals=n_pad * mem_p,                       # exp in the softmax
            bytes_accessed=(n_pad * fea_p * 2 + n_pad * mem_p) * x_isz
            + mem_p * fea_p * w_isz,
        )

        return pl.pallas_call(
            kernel,
            out_shape=(
                jax.ShapeDtypeStruct((n_pad, fea_p), x.dtype),
                jax.ShapeDtypeStruct((n_pad, mem_p), x.dtype),
            ),
            grid_spec=pltpu.PrefetchScalarGridSpec(
                num_scalar_prefetch=0,
                grid=(n_pad // tile_m,),
                in_specs=in_specs,
                out_specs=out_specs,
            ),
            compiler_params=pltpu.CompilerParams(
                dimension_semantics=("parallel",),
                vmem_limit_bytes=int(vmem_limit),
            ),
            cost_estimate=cost,
        )(*args)

    # Errors that indicate this backend build rejects pipeline_mode=Buffered(1);
    # any genuine problem (shape/VMEM OOM) reproduces in the fallback and propagates.
    fallback_errors = (TypeError, ValueError, NotImplementedError,
                       pltpu.LoweringException)
    _jre = getattr(getattr(jax, "errors", None), "JaxRuntimeError", None)
    if _jre is not None:
        fallback_errors = fallback_errors + (_jre,)

    try:
        out_p, att_p = _run(single_buffer_weight=True)
    except fallback_errors:
        out_p, att_p = _run(single_buffer_weight=False)

    return out_p[:n, :fea_dim], att_p[:n, :mem_dim]


def _reference_forward(x, weight, shrink_thres=0.0025):
    """Pure-JAX reference mirroring the PyTorch module (full-precision matmuls)."""
    hp = jax.lax.Precision.HIGHEST
    att = jnp.dot(x, weight.T, precision=hp)
    att = jax.nn.softmax(att, axis=1)
    if shrink_thres > 0:
        lam = shrink_thres
        eps = 1e-12
        shifted = att - lam
        att = jnp.maximum(shifted, 0.0) * att / (jnp.abs(shifted) + eps)
        att = att / jnp.maximum(jnp.sum(jnp.abs(att), axis=1, keepdims=True), 1e-12)
    out = jnp.dot(att, weight, precision=hp)
    return out, att


if __name__ == "__main__":
    # Small shapes consistent with the module; deliberately not 8/128-aligned so the
    # padding + additive-mask path is exercised.
    N, FEA_DIM, MEM_DIM = 20, 96, 50
    SHRINK = 0.0025

    key = jax.random.PRNGKey(0)
    k_x, k_w = jax.random.split(key)
    x = jax.random.normal(k_x, (N, FEA_DIM), dtype=jnp.float32)
    # Parameter(torch.randn(mem_dim, fea_dim)) -> standard normal init
    weight = jax.random.normal(k_w, (MEM_DIM, FEA_DIM), dtype=jnp.float32)

    out, att = memory_unit_forward(x, weight, SHRINK)
    out = jax.block_until_ready(out)
    att = jax.block_until_ready(att)

    ref_out, ref_att = _reference_forward(x, weight, SHRINK)
    assert out.shape == (N, FEA_DIM) and att.shape == (N, MEM_DIM)
    # Exact (non-approx) in-kernel math; tolerance only covers MXU-vs-XLA
    # accumulation-order differences.
    assert jnp.allclose(out, ref_out, atol=1e-4, rtol=1e-4), "output mismatch"
    assert jnp.allclose(att, ref_att, atol=1e-4, rtol=1e-4), "att_weight mismatch"

    print("KERNEL_OK")
</pallas_src>

<mosaic_0001>
module attributes {stable_mosaic.version = 11 : i64} {
  func.func @_memory_unit_kernel(%arg0: i32, %arg1: memref<8x128xf32, #tpu.memory_space<vmem>>, %arg2: memref<128x128xf32, #tpu.memory_space<vmem>>, %arg3: memref<1x128xf32, #tpu.memory_space<vmem>>, %arg4: memref<8x128xf32, #tpu.memory_space<vmem>>, %arg5: memref<8x128xf32, #tpu.memory_space<vmem>>) attributes {dimension_semantics = [#tpu.dimension_semantics<parallel>], iteration_bounds = array<i64: 3>, scalar_prefetch = 0 : i64, scratch_operands = 0 : i64, tpu.core_type = #tpu.core_type<tc>, window_params = [{transform_indices = @transform_0, window_bounds = array<i64: 8, 128>}, {pipeline_mode = #tpu.pipeline_mode<synchronous>, transform_indices = @transform_1, window_bounds = array<i64: 128, 128>}, {pipeline_mode = #tpu.pipeline_mode<synchronous>, transform_indices = @transform_2, window_bounds = array<i64: 1, 128>}, {transform_indices = @transform_3, window_bounds = array<i64: 8, 128>}, {transform_indices = @transform_4, window_bounds = array<i64: 8, 128>}]} {
    %c0 = arith.constant 0 : index
    %c0_0 = arith.constant 0 : index
    %0 = vector.load %arg1[%c0, %c0_0] : memref<8x128xf32, #tpu.memory_space<vmem>>, vector<8x128xf32>
    %c0_1 = arith.constant 0 : index
    %c0_2 = arith.constant 0 : index
    %1 = vector.load %arg2[%c0_1, %c0_2] : memref<128x128xf32, #tpu.memory_space<vmem>>, vector<128x128xf32>
    %cst = arith.constant dense<0.000000e+00> : vector<8x128xf32>
    %2 = tpu.matmul %0, %1, %cst {dimension_numbers = #tpu.dot_dimension_numbers<[1], [1], [0], [0], [0, 0, 1, 0], [], []>} : vector<8x128xf32>, vector<128x128xf32>, vector<8x128xf32> -> vector<8x128xf32>
    %c0_3 = arith.constant 0 : index
    %c0_4 = arith.constant 0 : index
    %3 = vector.load %arg3[%c0_3, %c0_4] : memref<1x128xf32, #tpu.memory_space<vmem>>, vector<1x128xf32>
    %4 = vector.broadcast %3 : vector<1x128xf32> to vector<8x128xf32>
    %5 = arith.addf %2, %4 : vector<8x128xf32>
    %cst_5 = arith.constant dense<0xFF800000> : vector<8xf32>
    %6 = vector.multi_reduction <maximumf>, %5, %cst_5 [1] : vector<8x128xf32> to vector<8xf32>
    %7 = vector.shape_cast %6 : vector<8xf32> to vector<8x1xf32>
    %8 = vector.broadcast %7 : vector<8x1xf32> to vector<8x128xf32>
    %9 = arith.subf %5, %8 : vector<8x128xf32>
    %10 = math.exp %9 : vector<8x128xf32>
    %cst_6 = arith.constant dense<0.000000e+00> : vector<8xf32>
    %11 = vector.multi_reduction <add>, %10, %cst_6 [1] : vector<8x128xf32> to vector<8xf32>
    %12 = vector.shape_cast %11 : vector<8xf32> to vector<8x1xf32>
    %13 = vector.broadcast %12 : vector<8x1xf32> to vector<8x128xf32>
    %14 = arith.divf %10, %13 : vector<8x128xf32>
    %cst_7 = arith.constant 2.500000e-03 : f32
    %15 = vector.broadcast %cst_7 : f32 to vector<8x128xf32>
    %16 = arith.subf %14, %15 : vector<8x128xf32>
    %cst_8 = arith.constant 0.000000e+00 : f32
    %17 = vector.broadcast %cst_8 : f32 to vector<8x128xf32>
    %18 = arith.maximumf %16, %17 : vector<8x128xf32>
    %19 = arith.mulf %18, %14 : vector<8x128xf32>
    %20 = math.absf %16 : vector<8x128xf32>
    %cst_9 = arith.constant 9.99999996E-13 : f32
    %21 = vector.broadcast %cst_9 : f32 to vector<8x128xf32>
    %22 = arith.addf %20, %21 : vector<8x128xf32>
    %23 = arith.divf %19, %22 : vector<8x128xf32>
    %cst_10 = arith.constant dense<0.000000e+00> : vector<8xf32>
    %24 = vector.multi_reduction <add>, %23, %cst_10 [1] : vector<8x128xf32> to vector<8xf32>
    %25 = vector.shape_cast %24 : vector<8xf32> to vector<8x1xf32>
    %cst_11 = arith.constant 9.99999996E-13 : f32
    %26 = vector.broadcast %cst_11 : f32 to vector<8x1xf32>
    %27 = arith.maximumf %25, %26 : vector<8x1xf32>
    %28 = vector.broadcast %27 : vector<8x1xf32> to vector<8x128xf32>
    %29 = arith.divf %23, %28 : vector<8x128xf32>
    %cst_12 = arith.constant dense<0.000000e+00> : vector<8x128xf32>
    %30 = tpu.matmul %29, %1, %cst_12 {dimension_numbers = #tpu.dot_dimension_numbers<[1], [0], [0], [1], [0, 0, 1, 1], [], []>} : vector<8x128xf32>, vector<128x128xf32>, vector<8x128xf32> -> vector<8x128xf32>
    %c0_13 = arith.constant 0 : index
    %c0_14 = arith.constant 0 : index
    %31 = vector.load %arg4[%c0_13, %c0_14] : memref<8x128xf32, #tpu.memory_space<vmem>>, vector<8x128xf32>
    tpu.vector_store %arg4[%c0_13, %c0_14], %30 {strides = array<i32>} : memref<8x128xf32, #tpu.memory_space<vmem>>, vector<8x128xf32>,
    %c0_15 = arith.constant 0 : index
    %c0_16 = arith.constant 0 : index
    %32 = vector.load %arg5[%c0_15, %c0_16] : memref<8x128xf32, #tpu.memory_space<vmem>>, vector<8x128xf32>
    tpu.vector_store %arg5[%c0_15, %c0_16], %29 {strides = array<i32>} : memref<8x128xf32, #tpu.memory_space<vmem>>, vector<8x128xf32>,
    return
  }
  func.func @transform_0(%arg0: i32) -> (i32, i32) {
    %c0_i32 = arith.constant 0 : i32
    %c0_i32_0 = arith.constant 0 : i32
    return %arg0, %c0_i32 : i32, i32
  }
  func.func @transform_1(%arg0: i32) -> (i32, i32) {
    %c0_i32 = arith.constant 0 : i32
    %c0_i32_0 = arith.constant 0 : i32
    %c0_i32_1 = arith.constant 0 : i32
    return %c0_i32, %c0_i32_0 : i32, i32
  }
  func.func @transform_2(%arg0: i32) -> (i32, i32) {
    %c0_i32 = arith.constant 0 : i32
    %c0_i32_0 = arith.constant 0 : i32
    %c0_i32_1 = arith.constant 0 : i32
    return %c0_i32, %c0_i32_0 : i32, i32
  }
  func.func @transform_3(%arg0: i32) -> (i32, i32) {
    %c0_i32 = arith.constant 0 : i32
    %c0_i32_0 = arith.constant 0 : i32
    return %arg0, %c0_i32 : i32, i32
  }
  func.func @transform_4(%arg0: i32) -> (i32, i32) {
    %c0_i32 = arith.constant 0 : i32
    %c0_i32_0 = arith.constant 0 : i32
    return %arg0, %c0_i32 : i32, i32
  }
}

</mosaic_0001>

<llo_original>
// kernel: tpu_custom_call.1
$region0: #{tpu_custom_call.1}
  #allocation0 [shape = 'u32[]', space=smem, size = 0x4, offset = 0x4, fixed_abs, tag = 'smem constant byte address 0x4 - core index']
  #allocation1 [shape = 'u32[144,128]{1,0:T(1,128)}', space=vmem, size = 0x12000, scoped, tag = 'internal scratch']
  %s0 = inlined_call_operand.hbm [shape: f32[24,128], index: 0, kind: input, shape index: {}]
  %s1 = inlined_call_operand.hbm [shape: f32[128,128], index: 1, kind: input, shape index: {}]
  %s2 = inlined_call_operand.vmem [shape: f32[1,128], index: 2, kind: input, shape index: {}]
  %s3 = inlined_call_operand.hbm [shape: f32[24,128], index: 3, kind: output, shape index: {0}]
  %s4 = inlined_call_operand.hbm [shape: f32[24,128], index: 4, kind: output, shape index: {1}]
  %5 = xla_tuple %s3, %s4
  %s6 = sld [smem:[#allocation0]]
  $region61: #{tpu_custom_call.1} parent=0
    _
  %s8 = ssub.s32 1, %s6
  %s9 = scalar_select 0, %s8, %s6
  $region1: #{tpu_custom_call.1} parent=0
    #allocation2 [shape = 'u8[8192]{0}', space=vmem, size = 0x2000, scoped, tag = 'input window, operand 0']
    #allocation3 [shape = 's32[2]{0}', space=sflag, size = 0x8, scoped, tag = 'scoped memory for tpu_custom_call.1']
    #allocation4 [shape = 's32[2]{0}', space=sflag, size = 0x8, scoped, tag = 'scoped memory for tpu_custom_call.1']
    #allocation5 [shape = 'u8[65536]{0}', space=vmem, size = 0x10000, scoped, tag = 'input window, operand 1, single buffered']
    #allocation6 [shape = 's32[1]{0}', space=sflag, size = 0x4, scoped, tag = 'scoped memory for tpu_custom_call.1']
    #allocation7 [shape = 'u8[8192]{0}', space=vmem, size = 0x2000, scoped, tag = 'output window, operand 0']
    #allocation8 [shape = 'u8[8192]{0}', space=vmem, size = 0x2000, scoped, tag = 'output window, operand 1']
    #allocation9 [shape = 's32[2]{0}', space=sflag, size = 0x8, scoped, tag = 'scoped memory for tpu_custom_call.1']
    %10 = vsyncpa [#allocation3], 0
    %s11 = scalar_lea.sflag [#allocation3], 1
    %12 = vsyncpa %s11, 0
    %13 = vsyncpa [#allocation6], 0
    %14 = vsyncpa [#allocation4], 0
    %s15 = scalar_lea.sflag [#allocation4], 1
    %16 = vsyncpa %s15, 0
    %17 = vsyncpa [#allocation9], 0
    %s18 = scalar_lea.sflag [#allocation9], 1
    %19 = vsyncpa %s18, 0
    loop: start=0, step=1, limit=5
    $region2: #{tpu_custom_call.1} parent=1 // loop_pre_header
      _
    $region3: #{tpu_custom_call.1} parent=1 // loop_header
      %s21 = sphi 0, %s25
      %p22 = scmp.ge.s32.totalorder %s21, 5
      %s31 = sphi 0, %s33
      %s34 = sphi 0, %s31
      %s35 = sphi 0, %s34
      %s51 = sphi 0, %s35
      %s55 = sphi 0, %s55
      %s57 = sphi 0, %s55
      %s58 = sphi 0, %s57
      %s72 = sphi 0, %s58
      %s76 = sphi 0, %s76
      %s78 = sphi 0, %s76
      %s79 = sphi 0, %s78
      %s93 = sphi 0, %s79
      %s99 = sphi 0, %s101
      %s102 = sphi 0, %s99
      %s103 = sphi 0, %s102
      %s119 = sphi 0, %s103
      %s125 = sphi 0, %s127
      %s128 = sphi 0, %s125
      %s129 = sphi 0, %s128
      %s145 = sphi 0, %s129
    $region4: #{tpu_custom_call.1} parent=1 // loop_header_branch
      %24 = sbr.rel (%p22) target = $region8
    $region5: #{tpu_custom_call.1} parent=1 // loop_body
      %s26 = ssub.s32 %s21, 1
      %s27 = ssub.s32 %s21, 2
      %s28 = sadd.s32 %s21, 1
      %s29 = ssub.s32 %s21, %s28
      %p30 = scmp.eq.s32.totalorder %s29, 0
      %s32 = sadd.s32 %s31, 1
      %s33 = scalar_select %p30, %s31, %s32
      %p36 = pneg %p30
      %p37 = scmp.eq.s32.totalorder %s21, 2
      %p38 = por %p36, %p37
      %p39 = scmp.ne.s32.totalorder %s31, %s34
      %p40 = scmp.eq.s32.totalorder %s21, 0
      %p41 = por %p39, %p40
      %p42 = scmp.ne.s32.totalorder %s31, %s34
      %p43 = scmp.eq.s32.totalorder %s26, 2
      %p44 = por %p42, %p43
      %p45 = scmp.ne.s32.totalorder %s34, %s35
      %p46 = scmp.eq.s32.totalorder %s26, 0
      %p47 = por %p45, %p46
      %p48 = scmp.ne.s32.totalorder %s34, %s35
      %p49 = scmp.eq.s32.totalorder %s27, 2
      %p50 = por %p48, %p49
      %p52 = scmp.ne.s32.totalorder %s35, %s51
      %p53 = scmp.eq.s32.totalorder %s27, 0
      %p54 = por %p52, %p53
      %s56 = sadd.s32 %s55, 1
      %p59 = scmp.eq.s32.totalorder %s21, 2
      %p60 = scmp.ne.s32.totalorder %s55, %s57
      %p61 = scmp.eq.s32.totalorder %s21, 0
      %p62 = por %p60, %p61
      %p63 = scmp.ne.s32.totalorder %s55, %s57
      %p64 = scmp.eq.s32.totalorder %s26, 2
      %p65 = por %p63, %p64
      %p66 = scmp.ne.s32.totalorder %s57, %s58
      %p67 = scmp.eq.s32.totalorder %s26, 0
      %p68 = por %p66, %p67
      %p69 = scmp.ne.s32.totalorder %s57, %s58
      %p70 = scmp.eq.s32.totalorder %s27, 2
      %p71 = por %p69, %p70
      %p73 = scmp.ne.s32.totalorder %s58, %s72
      %p74 = scmp.eq.s32.totalorder %s27, 0
      %p75 = por %p73, %p74
      %s77 = sadd.s32 %s76, 1
      %p80 = scmp.eq.s32.totalorder %s21, 2
      %p81 = scmp.ne.s32.totalorder %s76, %s78
      %p82 = scmp.eq.s32.totalorder %s21, 0
      %p83 = por %p81, %p82
      %p84 = scmp.ne.s32.totalorder %s76, %s78
      %p85 = scmp.eq.s32.totalorder %s26, 2
      %p86 = por %p84, %p85
      %p87 = scmp.ne.s32.totalorder %s78, %s79
      %p88 = scmp.eq.s32.totalorder %s26, 0
      %p89 = por %p87, %p88
      %p90 = scmp.ne.s32.totalorder %s78, %s79
      %p91 = scmp.eq.s32.totalorder %s27, 2
      %p92 = por %p90, %p91
      %p94 = scmp.ne.s32.totalorder %s79, %s93
      %p95 = scmp.eq.s32.totalorder %s27, 0
      %p96 = por %p94, %p95
      %s97 = ssub.s32 %s21, %s28
      %p98 = scmp.eq.s32.totalorder %s97, 0
      %s100 = sadd.s32 %s99, 1
      %s101 = scalar_select %p98, %s99, %s100
      %p104 = pneg %p98
      %p105 = scmp.eq.s32.totalorder %s21, 2
      %p106 = por %p104, %p105
      %p107 = scmp.ne.s32.totalorder %s99, %s102
      %p108 = scmp.eq.s32.totalorder %s21, 0
      %p109 = por %p107, %p108
      %p110 = scmp.ne.s32.totalorder %s99, %s102
      %p111 = scmp.eq.s32.totalorder %s26, 2
      %p112 = por %p110, %p111
      %p113 = scmp.ne.s32.totalorder %s102, %s103
      %p114 = scmp.eq.s32.totalorder %s26, 0
      %p115 = por %p113, %p114
      %p116 = scmp.ne.s32.totalorder %s102, %s103
      %p117 = scmp.eq.s32.totalorder %s27, 2
      %p118 = por %p116, %p117
      %p120 = scmp.ne.s32.totalorder %s103, %s119
      %p121 = scmp.eq.s32.totalorder %s27, 0
      %p122 = por %p120, %p121
      %s123 = ssub.s32 %s21, %s28
      %p124 = scmp.eq.s32.totalorder %s123, 0
      %s126 = sadd.s32 %s125, 1
      %s127 = scalar_select %p124, %s125, %s126
      %p130 = pneg %p124
      %p131 = scmp.eq.s32.totalorder %s21, 2
      %p132 = por %p130, %p131
      %p133 = scmp.ne.s32.totalorder %s125, %s128
      %p134 = scmp.eq.s32.totalorder %s21, 0
      %p135 = por %p133, %p134
      %p136 = scmp.ne.s32.totalorder %s125, %s128
      %p137 = scmp.eq.s32.totalorder %s26, 2
      %p138 = por %p136, %p137
      %p139 = scmp.ne.s32.totalorder %s128, %s129
      %p140 = scmp.eq.s32.totalorder %s26, 0
      %p141 = por %p139, %p140
      %p142 = scmp.ne.s32.totalorder %s128, %s129
      %p143 = scmp.eq.s32.totalorder %s27, 2
      %p144 = por %p142, %p143
      %p146 = scmp.ne.s32.totalorder %s129, %s145
      %p147 = scmp.eq.s32.totalorder %s27, 0
      %p148 = por %p146, %p147
      %p149 = scmp.le.s32.totalorder 1, %s21
      %p150 = scmp.lt.s32.totalorder %s21, 4
      %p151 = pnand %p149, %p150
      %p152 = pneg %p151
      // Predicated region
      $region9: #{tpu_custom_call.1} parent=5 // pred_check
        _
      $region10: #{tpu_custom_call.1} parent=5 // pred_check_branch
        %154 = sbr.rel (%p151) target = $region12
      $region11: #{tpu_custom_call.1} parent=5 // pred_region
        %s155 = ssub.s32 %s21, 1
        // Predicated region
        $region13: #{tpu_custom_call.1} parent=11 // pred_check
          %p156 = pneg %p68
        $region14: #{tpu_custom_call.1} parent=11 // pred_check_branch
          %158 = sbr.rel (%p156) target = $region16
        $region15: #{tpu_custom_call.1} parent=11 // pred_region
          %s160 = ssub.s32 2048, 2048
          %161 = vsyncadd [#allocation6], %s160
          %s162 = sshll.u32 [#allocation5], 4
          %s163 = int_to_ptr.vmem [resolvable:$true] %s162
          %168 = dma.hbm_to_vmem [thread:$0]  %s1, 2048, %s163, [#allocation6], 128, 128, 8
        $region16: #{tpu_custom_call.1} parent=11 // pred_fallthru
          _
        // Predicated region
        $region17: #{tpu_custom_call.1} parent=11 // pred_check
          %p169 = pneg %p89
        $region18: #{tpu_custom_call.1} parent=11 // pred_check_branch
          %171 = sbr.rel (%p169) target = $region20
        $region19: #{tpu_custom_call.1} parent=11 // pred_region
          _
        $region20: #{tpu_custom_call.1} parent=11 // pred_fallthru
          _
      $region12: #{tpu_custom_call.1} parent=5 // pred_fallthru
        _
      %p172 = scmp.lt.s32.totalorder %s21, 3
      // Predicated region
      $region21: #{tpu_custom_call.1} parent=5 // pred_check
        %p173 = pneg %p172
      $region22: #{tpu_custom_call.1} parent=5 // pred_check_branch
        %175 = sbr.rel (%p173) target = $region24
      $region23: #{tpu_custom_call.1} parent=5 // pred_region
        // Predicated region
        $region25: #{tpu_custom_call.1} parent=23 // pred_check
          %p176 = pneg %p41
        $region26: #{tpu_custom_call.1} parent=23 // pred_check_branch
          %178 = sbr.rel (%p176) target = $region28
        $region27: #{tpu_custom_call.1} parent=23 // pred_region
          %s179 = sand.u32 %s31, 1
          %s180 = scalar_lea.sflag [#allocation3], %s179
          %s181 = sand.u32 %s31, 1
          %s182 = smul.addr %s181, 8
          %s183 = scalar_lea.vmem [#allocation2], %s182
          %s185 = ssub.s32 128, 128
          %186 = vsyncadd %s180, %s185
          %s187 = smul.addr %s21, 128
          %s188 = scalar_lea.hbm %s0, %s187
          %s190 = sshll.u32 %s183, 4
          %s191 = int_to_ptr.vmem [resolvable:$true] %s190
          %193 = dma.hbm_to_vmem [thread:$0]  %s188, 128, %s191, %s180
        $region28: #{tpu_custom_call.1} parent=23 // pred_fallthru
          _
      $region24: #{tpu_custom_call.1} parent=5 // pred_fallthru
        _
      %p194 = scmp.le.s32.totalorder 1, %s21
      %p195 = scmp.lt.s32.totalorder %s21, 4
      %p196 = pnand %p194, %p195
      %p197 = pneg %p196
      // Predicated region
      $region29: #{tpu_custom_call.1} parent=5 // pred_check
        _
      $region30: #{tpu_custom_call.1} parent=5 // pred_check_branch
        %199 = sbr.rel (%p196) target = $region32
      $region31: #{tpu_custom_call.1} parent=5 // pred_region
        %s200 = ssub.s32 %s21, 1
        %s201 = sand.u32 %s34, 1
        %s202 = scalar_lea.sflag [#allocation3], %s201
        %s203 = sand.u32 %s34, 1
        %s204 = smul.addr %s203, 8
        %s205 = scalar_lea.vmem [#allocation2], %s204
        // Predicated region
        $region33: #{tpu_custom_call.1} parent=31 // pred_check
          %p206 = pneg %p47
        $region34: #{tpu_custom_call.1} parent=31 // pred_check_branch
          %208 = sbr.rel (%p206) target = $region36
        $region35: #{tpu_custom_call.1} parent=31 // pred_region
          %209 = dma.done %s202, 128
        $region36: #{tpu_custom_call.1} parent=31 // pred_fallthru
          _
        // Predicated region
        $region37: #{tpu_custom_call.1} parent=31 // pred_check
          %p210 = pneg %p68
        $region38: #{tpu_custom_call.1} parent=31 // pred_check_branch
          %212 = sbr.rel (%p210) target = $region40
        $region39: #{tpu_custom_call.1} parent=31 // pred_region
          %213 = dma.done [#allocation6], 2048
        $region40: #{tpu_custom_call.1} parent=31 // pred_fallthru
          _
        %s214 = sand.u32 %s34, 1
        %s215 = scalar_lea.sflag [#allocation3], %s214
        %s216 = sand.u32 %s34, 1
        %s217 = smul.addr %s216, 8
        %s218 = scalar_lea.vmem [#allocation2], %s217
        %p219 = pneg %p47
        %p220 = pneg %p44
        %p221 = pneg %p68
        %p222 = pneg %p65
        %p223 = pneg %p89
        %p224 = pneg %p86
        %p225 = pneg %p115
        %p226 = pneg %p112
        %s227 = sand.u32 %s102, 1
        %s228 = scalar_lea.sflag [#allocation4], %s227
        %s229 = sand.u32 %s102, 1
        %s230 = smul.addr %s229, 8
        %s231 = scalar_lea.vmem [#allocation7], %s230
        %p232 = pneg %p141
        %p233 = pneg %p138
        %s234 = sand.u32 %s128, 1
        %s235 = scalar_lea.sflag [#allocation9], %s234
        %s236 = sand.u32 %s128, 1
        %s237 = smul.addr %s236, 8
        %s238 = scalar_lea.vmem [#allocation8], %s237
        %v239 = vld [vmem:[%s205] sm:$0xff]
        %v240 = vld [vmem:[#allocation5] sm:$0xff]
        %v241 = vld [vmem:[#allocation5 + $0x8] sm:$0xff]
        %v242 = vld [vmem:[#allocation5 + $0x10] sm:$0xff]
        %v243 = vld [vmem:[#allocation5 + $0x18] sm:$0xff]
        %v244 = vld [vmem:[#allocation5 + $0x20] sm:$0xff]
        %v245 = vld [vmem:[#allocation5 + $0x28] sm:$0xff]
        %v246 = vld [vmem:[#allocation5 + $0x30] sm:$0xff]
        %v247 = vld [vmem:[#allocation5 + $0x38] sm:$0xff]
        %v248 = vld [vmem:[#allocation5 + $0x40] sm:$0xff]
        %v249 = vld [vmem:[#allocation5 + $0x48] sm:$0xff]
        %v250 = vld [vmem:[#allocation5 + $0x50] sm:$0xff]
        %v251 = vld [vmem:[#allocation5 + $0x58] sm:$0xff]
        %v252 = vld [vmem:[#allocation5 + $0x60] sm:$0xff]
        %v253 = vld [vmem:[#allocation5 + $0x68] sm:$0xff]
        %v254 = vld [vmem:[#allocation5 + $0x70] sm:$0xff]
        %v255 = vld [vmem:[#allocation5 + $0x78] sm:$0xff]
        %v256 = vld [vmem:[%s2] sm:$0x1]
        %v258 = vlaneseq
        %v259 = vshrl.u32 %v258, 7
        %v260 = vsub.s32 0, %v259
        %v261 = vrot.slane %v256, %v260
        %263 = vmatprep.subr.mxu0 0.0
        %264 = vmatpush1.xpose.msra.mxu0 %v240
        %265 = vmatprep.subr.mxu0 0.0
        %266 = vmatpush1.xpose.msra.mxu0 %v241
        %267 = vmatprep.subr.mxu0 0.0
        %268 = vmatpush1.xpose.msra.mxu0 %v242
        %269 = vmatprep.subr.mxu0 0.0
        %270 = vmatpush1.xpose.msra.mxu0 %v243
        %271 = vmatprep.subr.mxu0 0.0
        %272 = vmatpush1.xpose.msra.mxu0 %v244
        %273 = vmatprep.subr.mxu0 0.0
        %274 = vmatpush1.xpose.msra.mxu0 %v245
        %275 = vmatprep.subr.mxu0 0.0
        %276 = vmatpush1.xpose.msra.mxu0 %v246
        %277 = vmatprep.subr.mxu0 0.0
        %278 = vmatpush1.xpose.msra.mxu0 %v247
        %279 = vmatprep.subr.mxu0 0.0
        %280 = vmatpush1.xpose.msra.mxu0 %v248
        %281 = vmatprep.subr.mxu0 0.0
        %282 = vmatpush1.xpose.msra.mxu0 %v249
        %283 = vmatprep.subr.mxu0 0.0
        %284 = vmatpush1.xpose.msra.mxu0 %v250
        %285 = vmatprep.subr.mxu0 0.0
        %286 = vmatpush1.xpose.msra.mxu0 %v251
        %287 = vmatprep.subr.mxu0 0.0
        %288 = vmatpush1.xpose.msra.mxu0 %v252
        %289 = vmatprep.subr.mxu0 0.0
        %290 = vmatpush1.xpose.msra.mxu0 %v253
        %291 = vmatprep.subr.mxu0 0.0
        %292 = vmatpush1.xpose.msra.mxu0 %v254
        %293 = vmatprep.subr.mxu0 0.0
        %294 = vmatpush1.xpose.msra.mxu0 %v255
        %295 = vmatprep.subr.mxu0 0.0
        %296 = vmatpush1.xpose.msra.mxu0 0.0
        %297 = vmatprep.subr.mxu0 0.0
        %298 = vmatpush1.xpose.msra.mxu0 0.0
        %299 = vmatprep.subr.mxu0 0.0
        %300 = vmatpush1.xpose.msra.mxu0 0.0
        %301 = vmatprep.subr.mxu0 0.0
        %302 = vmatpush1.xpose.msra.mxu0 0.0
        %303 = vmatprep.subr.mxu0 0.0
        %304 = vmatpush1.xpose.msra.mxu0 0.0
        %305 = vmatprep.subr.mxu0 0.0
        %306 = vmatpush1.xpose.msra.mxu0 0.0
        %307 = vmatprep.subr.mxu0 0.0
        %308 = vmatpush1.xpose.msra.mxu0 0.0
        %309 = vmatprep.subr.mxu0 0.0
        %310 = vmatpush1.xpose.msra.mxu0 0.0
        %311 = vmatprep.subr.mxu0 0.0
        %312 = vmatpush1.xpose.msra.mxu0 0.0
        %313 = vmatprep.subr.mxu0 0.0
        %314 = vmatpush1.xpose.msra.mxu0 0.0
        %315 = vmatprep.subr.mxu0 0.0
        %316 = vmatpush1.xpose.msra.mxu0 0.0
        %317 = vmatprep.subr.mxu0 0.0
        %318 = vmatpush1.xpose.msra.mxu0 0.0
        %319 = vmatprep.subr.mxu0 0.0
        %320 = vmatpush1.xpose.msra.mxu0 0.0
        %321 = vmatprep.subr.mxu0 0.0
        %322 = vmatpush1.xpose.msra.mxu0 0.0
        %323 = vmatprep.subr.mxu0 0.0
        %324 = vmatpush1.xpose.msra.mxu0 0.0
        %325 = vmatprep.subr.mxu0 0.0
        %326 = vmatpush1.xpose.msra.mxu0 0.0
        %327 = vmatprep.mubr.f32.mxu0 0.0
        %328 = vmatmul.mubr.f32.gmra.mrb[0].mxu0 %v239
        %v329 = vpop.f32.mrb[0].mxu0
        %v330 = vadd.f32 %v261, %v329
        %v331 = vpop.f32.mrb[0].mxu0
        %332 = vdwg.mxu0
        %333 = vmax.xlane.f32.xlu0 %v330
        %v334 = vpop.xlane.xlu0 %333
        %v335 = vsub.f32 %v330, %v334
        %v336 = vmul.f32 %v335, 1.442695
        %v337 = vpow.pop %v336
        %338 = vadd.xlane.f32.xlu0 %v337
        %v339 = vpop.xlane.xlu0 %338
        %v340 = vrcp.pop %v339
        %v341 = vmul.f32 %v337, %v340
        %v342 = vsub.f32 %v341, 0.0025
        %v343 = vmax.f32 %v342, 0.0
        %v344 = vmul.f32 %v343, %v341
        %v345 = vand.u32 2147483647, %v342
        %v346 = vadd.f32 %v345, 1e-12
        %v347 = vrcp.pop %v346
        %v348 = vmul.f32 %v344, %v347
        %349 = vadd.xlane.f32.xlu0 %v348
        %v350 = vpop.xlane.xlu0 %349
        %v351 = vmax.f32 %v350, 1e-12
        %v352 = vrcp.pop %v351
        %v353 = vmul.f32 %v348, %v352
        %354 = vmatprep.subr.mxu0 0.0
        %355 = vmatpush1.msra.mxu0 %v240
        %356 = vmatprep.subr.mxu0 0.0
        %357 = vmatpush1.msra.mxu0 %v241
        %358 = vmatprep.subr.mxu0 0.0
        %359 = vmatpush1.msra.mxu0 %v242
        %360 = vmatprep.subr.mxu0 0.0
        %361 = vmatpush1.msra.mxu0 %v243
        %362 = vmatprep.subr.mxu0 0.0
        %363 = vmatpush1.msra.mxu0 %v244
        %364 = vmatprep.subr.mxu0 0.0
        %365 = vmatpush1.msra.mxu0 %v245
        %366 = vmatprep.subr.mxu0 0.0
        %367 = vmatpush1.msra.mxu0 %v246
        %368 = vmatprep.subr.mxu0 0.0
        %369 = vmatpush1.msra.mxu0 %v247
        %370 = vmatprep.subr.mxu0 0.0
        %371 = vmatpush1.msra.mxu0 %v248
        %372 = vmatprep.subr.mxu0 0.0
        %373 = vmatpush1.msra.mxu0 %v249
        %374 = vmatprep.subr.mxu0 0.0
        %375 = vmatpush1.msra.mxu0 %v250
        %376 = vmatprep.subr.mxu0 0.0
        %377 = vmatpush1.msra.mxu0 %v251
        %378 = vmatprep.subr.mxu0 0.0
        %379 = vmatpush1.msra.mxu0 %v252
        %380 = vmatprep.subr.mxu0 0.0
        %381 = vmatpush1.msra.mxu0 %v253
        %382 = vmatprep.subr.mxu0 0.0
        %383 = vmatpush1.msra.mxu0 %v254
        %384 = vmatprep.subr.mxu0 0.0
        %385 = vmatpush1.msra.mxu0 %v255
        %386 = vmatprep.subr.mxu0 0.0
        %387 = vmatpush1.msra.mxu0 0.0
        %388 = vmatprep.subr.mxu0 0.0
        %389 = vmatpush1.msra.mxu0 0.0
        %390 = vmatprep.subr.mxu0 0.0
        %391 = vmatpush1.msra.mxu0 0.0
        %392 = vmatprep.subr.mxu0 0.0
        %393 = vmatpush1.msra.mxu0 0.0
        %394 = vmatprep.subr.mxu0 0.0
        %395 = vmatpush1.msra.mxu0 0.0
        %396 = vmatprep.subr.mxu0 0.0
        %397 = vmatpush1.msra.mxu0 0.0
        %398 = vmatprep.subr.mxu0 0.0
        %399 = vmatpush1.msra.mxu0 0.0
        %400 = vmatprep.subr.mxu0 0.0
        %401 = vmatpush1.msra.mxu0 0.0
        %402 = vmatprep.subr.mxu0 0.0
        %403 = vmatpush1.msra.mxu0 0.0
        %404 = vmatprep.subr.mxu0 0.0
        %405 = vmatpush1.msra.mxu0 0.0
        %406 = vmatprep.subr.mxu0 0.0
        %407 = vmatpush1.msra.mxu0 0.0
        %408 = vmatprep.subr.mxu0 0.0
        %409 = vmatpush1.msra.mxu0 0.0
        %410 = vmatprep.subr.mxu0 0.0
        %411 = vmatpush1.msra.mxu0 0.0
        %412 = vmatprep.subr.mxu0 0.0
        %413 = vmatpush1.msra.mxu0 0.0
        %414 = vmatprep.subr.mxu0 0.0
        %415 = vmatpush1.msra.mxu0 0.0
        %416 = vmatprep.subr.mxu0 0.0
        %417 = vmatpush1.msra.mxu0 0.0
        %418 = vmatprep.mubr.f32.mxu0 0.0
        %419 = vmatmul.mubr.f32.gmra.mrb[0].mxu0 %v353
        %v420 = vpop.f32.mrb[0].mxu0
        %v421 = vadd.f32 0.0, %v420
        %v422 = vpop.f32.mrb[0].mxu0
        %423 = vdwg.mxu0
        %424 = vst [vmem:[%s231] sm:$0xff] %v421
        %425 = vst [vmem:[%s238] sm:$0xff] %v353
        %s426 = sand.u32 %s102, 1
        %s427 = scalar_lea.sflag [#allocation4], %s426
        %s428 = sand.u32 %s102, 1
        %s429 = smul.addr %s428, 8
        %s430 = scalar_lea.vmem [#allocation7], %s429
        %s431 = sand.u32 %s128, 1
        %s432 = scalar_lea.sflag [#allocation9], %s431
        %s433 = sand.u32 %s128, 1
        %s434 = smul.addr %s433, 8
        %s435 = scalar_lea.vmem [#allocation8], %s434
        // Predicated region
        $region41: #{tpu_custom_call.1} parent=31 // pred_check
          %p436 = pneg %p112
        $region42: #{tpu_custom_call.1} parent=31 // pred_check_branch
          %438 = sbr.rel (%p436) target = $region44
        $region43: #{tpu_custom_call.1} parent=31 // pred_region
          %s440 = ssub.s32 128, 128
          %441 = vsyncadd %s427, %s440
          %s442 = smul.addr %s26, 128
          %s443 = scalar_lea.hbm %s3, %s442
          %s445 = sshll.u32 %s430, 4
          %s446 = int_to_ptr.vmem [resolvable:$true] %s445
          %448 = dma.vmem_to_hbm [thread:$0]  %s446, 128, %s443, %s427
        $region44: #{tpu_custom_call.1} parent=31 // pred_fallthru
          _
        // Predicated region
        $region45: #{tpu_custom_call.1} parent=31 // pred_check
          %p449 = pneg %p138
        $region46: #{tpu_custom_call.1} parent=31 // pred_check_branch
          %451 = sbr.rel (%p449) target = $region48
        $region47: #{tpu_custom_call.1} parent=31 // pred_region
          %s453 = ssub.s32 128, 128
          %454 = vsyncadd %s432, %s453
          %s455 = smul.addr %s26, 128
          %s456 = scalar_lea.hbm %s4, %s455
          %s458 = sshll.u32 %s435, 4
          %s459 = int_to_ptr.vmem [resolvable:$true] %s458
          %461 = dma.vmem_to_hbm [thread:$0]  %s459, 128, %s456, %s432
        $region48: #{tpu_custom_call.1} parent=31 // pred_fallthru
          _
      $region32: #{tpu_custom_call.1} parent=5 // pred_fallthru
        _
      %p462 = scmp.le.s32.totalorder 2, %s21
      // Predicated region
      $region49: #{tpu_custom_call.1} parent=5 // pred_check
        %p463 = pneg %p462
      $region50: #{tpu_custom_call.1} parent=5 // pred_check_branch
        %465 = sbr.rel (%p463) target = $region52
      $region51: #{tpu_custom_call.1} parent=5 // pred_region
        %s466 = ssub.s32 %s21, 2
        // Predicated region
        $region53: #{tpu_custom_call.1} parent=51 // pred_check
          %p467 = pneg %p118
        $region54: #{tpu_custom_call.1} parent=51 // pred_check_branch
          %469 = sbr.rel (%p467) target = $region56
        $region55: #{tpu_custom_call.1} parent=51 // pred_region
          %s470 = sand.u32 %s103, 1
          %s471 = scalar_lea.sflag [#allocation4], %s470
          %s472 = sand.u32 %s103, 1
          %s473 = smul.addr %s472, 8
          %s474 = scalar_lea.vmem [#allocation7], %s473
          %475 = dma.done %s471, 128
        $region56: #{tpu_custom_call.1} parent=51 // pred_fallthru
          _
        // Predicated region
        $region57: #{tpu_custom_call.1} parent=51 // pred_check
          %p476 = pneg %p144
        $region58: #{tpu_custom_call.1} parent=51 // pred_check_branch
          %478 = sbr.rel (%p476) target = $region60
        $region59: #{tpu_custom_call.1} parent=51 // pred_region
          %s479 = sand.u32 %s129, 1
          %s480 = scalar_lea.sflag [#allocation9], %s479
          %s481 = sand.u32 %s129, 1
          %s482 = smul.addr %s481, 8
          %s483 = scalar_lea.vmem [#allocation8], %s482
          %484 = dma.done %s480, 128
        $region60: #{tpu_custom_call.1} parent=51 // pred_fallthru
          _
      $region52: #{tpu_custom_call.1} parent=5 // pred_fallthru
        _
    $region6: #{tpu_custom_call.1} parent=1 // loop_footer
      %s25 = sadd.s32 1, %s21
    $region7: #{tpu_custom_call.1} parent=1 // loop_footer_branch
      %20 = sbr.rel target = $region3
    $region8: #{tpu_custom_call.1} parent=1 // loop_exit
      _
    %485 = vsyncpa [#allocation3], 1
    %s486 = scalar_lea.sflag [#allocation3], 1
    %487 = vsyncpa %s486, 1
    %488 = vsyncpa [#allocation6], 1
    %489 = vsyncpa [#allocation4], 1
    %s490 = scalar_lea.sflag [#allocation4], 1
    %491 = vsyncpa %s490, 1
    %492 = vsyncpa [#allocation9], 1
    %s493 = scalar_lea.sflag [#allocation9], 1
    %494 = vsyncpa %s493, 1

</llo_original>
